<compile_context>
chip_gen: v7x
topology: tpu7x:2x2x1
jax: 0.10.0
libtpu: 0.0.40
codegen_flags: <defaults>
</compile_context>

<pallas_src>
import functools
import math

import numpy as np
import jax
import jax.numpy as jnp
from jax.experimental import pallas as pl
from jax.experimental.pallas import tpu as pltpu


# ----------------------------------------------------------------------------
# Small helpers
# ----------------------------------------------------------------------------
_MAX_MTILE = 256   # rows per grid step; fills the 256-row MXU side on v6e/v7x


def _cdiv(a, b):
    return -(-a // b)


def _round_up(a, b):
    return _cdiv(a, b) * b


def _tensorcores_per_chip():
    """Best-effort query; falls back to 1 (v5e/v6e behaviour) on any failure."""
    try:
        info = pltpu.get_tpu_info()
    except Exception:
        return 1
    for attr in ("num_cores", "num_cores_per_chip", "tensorcores_per_chip",
                 "cores_per_chip", "num_tensorcores"):
        v = getattr(info, attr, None)
        if isinstance(v, int) and v > 0:
            return v
    return 1


def _choose_tiling(M):
    """Pick (row-tile, grid-steps).  Prefer one big (<=256-row) tile; on chips with
    more than one TensorCore keep >= num_cores balanced steps for the parallel axis."""
    cores = _tensorcores_per_chip()
    Mpad = _round_up(M, 8)
    steps = _cdiv(Mpad, _MAX_MTILE)
    if cores > 1 and Mpad >= 8 * cores:
        steps = max(steps, cores)
    mtile = _round_up(_cdiv(Mpad, steps), 8)
    return mtile, steps


# ----------------------------------------------------------------------------
# Pallas kernel: one matmul + fused epilogue per row tile.
# ----------------------------------------------------------------------------
def _kernel(x_ref, w_ref, b_ref, o_ref, *, scale, clip_hi):
    # x_ref: (mtile, Kpad)  bf16   sub-pixel im2col rows (2 input rows per row)
    # w_ref: (Kpad, Ncols)  bf16   folded transposed-conv weights (constant block)
    # b_ref: (1, Ncols)     f32    conv_bias + bias, tiled per output column
    # o_ref: (mtile, Ncols)        two output-row parities per input row
    acc = jnp.dot(x_ref[...], w_ref[...], preferred_element_type=jnp.float32)
    y = acc + b_ref[...]
    if clip_hi is not None:
        # clamp(y,0,1)*s -> clamp(0,1) -> /s  ==  clamp(y, 0, min(1, 1/s))
        # (bit-exact for power-of-two s; chosen at trace time)
        o_ref[...] = jnp.clip(y, 0.0, clip_hi).astype(o_ref.dtype)
    else:
        y = jnp.clip(y, 0.0, 1.0)
        o_ref[...] = (jnp.clip(y * scale, 0.0, 1.0) / scale).astype(o_ref.dtype)


# ----------------------------------------------------------------------------
# Host-side (numpy) weight folding — runs ONCE, outside the jit/call path.
#
# LHS row layout (length 2*(W+1)*Cin):  (r, iw, ci)   r in {0,1} = input row i / i+1
# RHS col layout (length 2*W*2*Cout):   (dh, j, dw, co)
#   out[n, 2*i+dh, 2*j+dw, co] = LHS(n,i) @ RHS[:, (dh,j,dw,co)]
# ----------------------------------------------------------------------------
def _build_subpixel_weight_np(conv_w, W):
    conv_w = np.asarray(conv_w, np.float32)          # (Cin, Cout, 3, 3)
    Cin, Cout, K, _ = conv_w.shape
    Wp = W + 1
    row_blk = Wp * Cin
    col_blk = W * 2 * Cout

    # kh -> (output row parity dh, input row offset r);  kw -> (dw, col offset b)
    kh_map = {1: (0, 0), 0: (1, 1), 2: (1, 0)}
    kw_map = {1: (0, 0), 0: (1, 1), 2: (1, 0)}

    w_full = np.zeros((2 * row_blk, 2 * col_blk), np.float32)
    for kh in range(K):
        dh, r = kh_map[kh]
        for kw in range(K):
            dw, b = kw_map[kw]
            eye = np.eye(Wp, W, k=-b, dtype=np.float32)          # E[j+b, j] = 1
            w_sel = np.zeros((Cin, 2 * Cout), np.float32)
            w_sel[:, dw * Cout:(dw + 1) * Cout] = conv_w[:, :, kh, kw]
            w_full[r * row_blk:(r + 1) * row_blk,
                   dh * col_blk:(dh + 1) * col_blk] += np.kron(eye, w_sel)
    return w_full


def prepare_folded_params(conv_w, conv_b, bias, W, *, stride, padding,
                          output_padding, kernel_size,
                          compute_dtype=jnp.bfloat16):
    """Fold the transposed-conv weights into the sub-pixel matmul matrix and fuse
    both biases.  Pure numpy; call once (weights are static at inference)."""
    assert (stride, padding, output_padding, kernel_size) == (2, 1, 1, 3), \
        "kernel specialized to ConvTranspose2d(k=3, stride=2, pad=1, out_pad=1)"
    conv_w = np.asarray(jax.device_get(conv_w), np.float32)
    conv_b = np.asarray(jax.device_get(conv_b), np.float32)
    bias = np.asarray(jax.device_get(bias), np.float32).reshape(-1)

    Cin, Cout = conv_w.shape[0], conv_w.shape[1]
    Kdim = 2 * (W + 1) * Cin
    Kpad = _round_up(max(Kdim, 128), 128)     # lane-aligned LHS / 16-sublane bf16 weight
    Ncols = 2 * W * 2 * Cout

    w_full = _build_subpixel_weight_np(conv_w, W)               # (Kdim, Ncols)
    w_pad = np.zeros((Kpad, Ncols), np.float32)
    w_pad[:Kdim] = w_full

    b_full = np.tile(conv_b + bias, 2 * W * 2).reshape(1, Ncols)

    return jnp.asarray(w_pad, compute_dtype), jnp.asarray(b_full, jnp.float32)


# ----------------------------------------------------------------------------
# Wrapper: NCHW in, NCHW (default) or NHWC out.
# ----------------------------------------------------------------------------
def conv_transpose_bias_clamp(x, w_folded, b_folded, *, scaling_factor,
                              out_channels, output_layout="NCHW",
                              out_dtype=jnp.float32,
                              compute_dtype=jnp.bfloat16):
    """x: (N, Cin, H, W) f32; w_folded/b_folded from prepare_folded_params.
    Returns (N, Cout, 2H, 2W) (NCHW) or (N, 2H, 2W, Cout) (NHWC)."""
    N, Cin, H, W = x.shape
    Kpad, Ncols = w_folded.shape
    Cout = out_channels
    assert Ncols == 2 * W * 2 * Cout, "folded params were built for a different W/Cout"
    Kdim = 2 * (W + 1) * Cin
    assert Kdim <= Kpad
    Hout, Wout = 2 * H, 2 * W

    # --- glue: sub-pixel im2col LHS (one pair of input rows per output row pair) ---
    x_nhwc = jnp.transpose(x, (0, 2, 3, 1))                       # (N, H, W, Cin)
    x_pad = jnp.pad(x_nhwc, ((0, 0), (0, 1), (0, 1), (0, 0)))     # (N, H+1, W+1, Cin)
    rows = x_pad.reshape(N, H + 1, (W + 1) * Cin)
    # TODO(synk): at large H*W*Cin replace this 2x row duplication by feeding `rows`
    # once with halo / element-offset indexing (or a manual-DMA pipeline).
    lhs = jnp.concatenate([rows[:, :H, :], rows[:, 1:, :]], axis=-1)   # (N, H, Kdim)
    lhs = lhs.reshape(N * H, Kdim)

    M = N * H
    mtile, grid_m = _choose_tiling(M)
    Mpad = mtile * grid_m
    lhs = jnp.pad(lhs, ((0, Mpad - M), (0, Kpad - Kdim))).astype(compute_dtype)

    # --- epilogue constants (trace-time) --------------------------------------------
    scale = float(scaling_factor)
    mant, _ = math.frexp(scale) if scale > 0 else (0.0, 0)
    clip_hi = min(1.0, 1.0 / scale) if (scale > 0 and mant == 0.5) else None

    # --- scheduling hints ------------------------------------------------------------
    out_isize = jnp.dtype(out_dtype).itemsize
    flops = 2 * Mpad * Kpad * Ncols
    bytes_accessed = (Mpad * Kpad * 2 + Kpad * Ncols * 2 + Ncols * 4
                      + Mpad * Ncols * out_isize)
    vmem_need = 2 * (mtile * Kpad * 2 + Kpad * Ncols * 2 + Ncols * 4
                     + mtile * Ncols * out_isize) + (1 << 20)
    vmem_limit = int(min(max(vmem_need, 16 << 20), 64 << 20))

    out2d = pl.pallas_call(
        functools.partial(_kernel, scale=scale, clip_hi=clip_hi),
        out_shape=jax.ShapeDtypeStruct((Mpad, Ncols), out_dtype),
        grid=(grid_m,),
        in_specs=[
            pl.BlockSpec((mtile, Kpad), lambda m: (m, 0)),
            pl.BlockSpec((Kpad, Ncols), lambda m: (0, 0)),   # constant -> DMA'd once
            pl.BlockSpec((1, Ncols), lambda m: (0, 0)),      # constant -> DMA'd once
        ],
        out_specs=pl.BlockSpec((mtile, Ncols), lambda m: (m, 0)),
        compiler_params=pltpu.CompilerParams(
            dimension_semantics=("parallel",),               # megacore sharding on v7x
            vmem_limit_bytes=vmem_limit),
        cost_estimate=pl.CostEstimate(flops=flops, transcendentals=0,
                                      bytes_accessed=bytes_accessed),
    )(lhs, w_folded, b_folded)

    # Pure reshape (columns are ordered (dh, j, dw, co)) -> NHWC.
    out_nhwc = out2d[:M].reshape(N, Hout, Wout, Cout)
    if output_layout == "NHWC":
        return out_nhwc
    return jnp.transpose(out_nhwc, (0, 3, 1, 2))             # PyTorch NCHW contract


# ----------------------------------------------------------------------------
# Pure-JAX (XLA) reference for validation.
# ----------------------------------------------------------------------------
def _reference(x, conv_w, conv_b, bias, stride, padding, output_padding, scale):
    K = conv_w.shape[-1]
    p_lo = K - 1 - padding
    p_hi = K - 1 - padding + output_padding
    w_fwd = jnp.transpose(jnp.flip(conv_w, (2, 3)), (1, 0, 2, 3))     # OIHW
    y = jax.lax.conv_general_dilated(
        x, w_fwd, window_strides=(1, 1),
        padding=[(p_lo, p_hi), (p_lo, p_hi)],
        lhs_dilation=(stride, stride),
        dimension_numbers=("NCHW", "OIHW", "NCHW"))
    y = y + conv_b[None, :, None, None] + bias[None, :, :, :]
    y = jnp.clip(y, 0.0, 1.0) * scale
    y = jnp.clip(y, 0.0, 1.0) / scale
    return y


if __name__ == "__main__":
    in_channels = 3
    out_channels = 16
    kernel_size = 3
    stride = 2
    padding = 1
    output_padding = 1
    scaling_factor = 2.0

    batch, H, W = 2, 16, 16
    key = jax.random.PRNGKey(0)
    kx, kw_, kb_, kbias = jax.random.split(key, 4)

    x = jax.random.normal(kx, (batch, in_channels, H, W), jnp.float32)
    conv_w = jax.random.normal(kw_, (in_channels, out_channels, kernel_size, kernel_size),
                               jnp.float32) * 0.1
    conv_b = jax.random.normal(kb_, (out_channels,), jnp.float32) * 0.1
    bias = jax.random.normal(kbias, (out_channels, 1, 1), jnp.float32) * 0.02

    # Weight folding runs once, host-side — not part of the per-call jit path.
    w_folded, b_folded = prepare_folded_params(
        conv_w, conv_b, bias, W, stride=stride, padding=padding,
        output_padding=output_padding, kernel_size=kernel_size)

    fn = jax.jit(functools.partial(conv_transpose_bias_clamp,
                                   scaling_factor=scaling_factor,
                                   out_channels=out_channels))
    out = jax.block_until_ready(fn(x, w_folded, b_folded))

    ref = jax.block_until_ready(
        _reference(x, conv_w, conv_b, bias, stride, padding, output_padding,
                   scaling_factor))

    assert out.shape == (batch, out_channels, 2 * H, 2 * W), out.shape
    max_err = float(jnp.max(jnp.abs(out - ref)))
    assert jnp.allclose(out, ref, atol=2e-2, rtol=2e-2), max_err
    print("KERNEL_OK")
</pallas_src>

<mosaic_0001>
module attributes {stable_mosaic.version = 11 : i64} {
  func.func @_kernel(%arg0: i32, %arg1: memref<32x128xbf16, #tpu.memory_space<vmem>>, %arg2: memref<128x1024xbf16, #tpu.memory_space<vmem>>, %arg3: memref<1x1024xf32, #tpu.memory_space<vmem>>, %arg4: memref<32x1024xf32, #tpu.memory_space<vmem>>) attributes {dimension_semantics = [#tpu.dimension_semantics<parallel>], iteration_bounds = array<i64: 1>, scalar_prefetch = 0 : i64, scratch_operands = 0 : i64, tpu.core_type = #tpu.core_type<tc>, window_params = [{transform_indices = @transform_0, window_bounds = array<i64: 32, 128>}, {pipeline_mode = #tpu.pipeline_mode<synchronous>, transform_indices = @transform_1, window_bounds = array<i64: 128, 1024>}, {pipeline_mode = #tpu.pipeline_mode<synchronous>, transform_indices = @transform_2, window_bounds = array<i64: 1, 1024>}, {transform_indices = @transform_3, window_bounds = array<i64: 32, 1024>}]} {
    %c0 = arith.constant 0 : index
    %c0_0 = arith.constant 0 : index
    %0 = vector.load %arg1[%c0, %c0_0] : memref<32x128xbf16, #tpu.memory_space<vmem>>, vector<32x128xbf16>
    %c0_1 = arith.constant 0 : index
    %c0_2 = arith.constant 0 : index
    %1 = vector.load %arg2[%c0_1, %c0_2] : memref<128x1024xbf16, #tpu.memory_space<vmem>>, vector<128x1024xbf16>
    %cst = arith.constant dense<0.000000e+00> : vector<32x1024xf32>
    %2 = tpu.matmul %0, %1, %cst {dimension_numbers = #tpu.dot_dimension_numbers<[1], [0], [0], [1], [0, 0, 1, 1], [], []>} : vector<32x128xbf16>, vector<128x1024xbf16>, vector<32x1024xf32> -> vector<32x1024xf32>
    %c0_3 = arith.constant 0 : index
    %c0_4 = arith.constant 0 : index
    %3 = vector.load %arg3[%c0_3, %c0_4] : memref<1x1024xf32, #tpu.memory_space<vmem>>, vector<1x1024xf32>
    %4 = vector.broadcast %3 : vector<1x1024xf32> to vector<32x1024xf32>
    %5 = arith.addf %2, %4 : vector<32x1024xf32>
    %cst_5 = arith.constant 0.000000e+00 : f32
    %cst_6 = arith.constant 5.000000e-01 : f32
    %6 = vector.broadcast %cst_5 : f32 to vector<32x1024xf32>
    %7 = arith.maximumf %6, %5 : vector<32x1024xf32>
    %8 = vector.broadcast %cst_6 : f32 to vector<32x1024xf32>
    %9 = arith.minimumf %8, %7 : vector<32x1024xf32>
    %c0_7 = arith.constant 0 : index
    %c0_8 = arith.constant 0 : index
    %10 = vector.load %arg4[%c0_7, %c0_8] : memref<32x1024xf32, #tpu.memory_space<vmem>>, vector<32x1024xf32>
    tpu.vector_store %arg4[%c0_7, %c0_8], %9 {strides = array<i32>} : memref<32x1024xf32, #tpu.memory_space<vmem>>, vector<32x1024xf32>,
    return
  }
  func.func @transform_0(%arg0: i32) -> (i32, i32) {
    %c0_i32 = arith.constant 0 : i32
    %c0_i32_0 = arith.constant 0 : i32
    return %arg0, %c0_i32 : i32, i32
  }
  func.func @transform_1(%arg0: i32) -> (i32, i32) {
    %c0_i32 = arith.constant 0 : i32
    %c0_i32_0 = arith.constant 0 : i32
    %c0_i32_1 = arith.constant 0 : i32
    return %c0_i32, %c0_i32_0 : i32, i32
  }
  func.func @transform_2(%arg0: i32) -> (i32, i32) {
    %c0_i32 = arith.constant 0 : i32
    %c0_i32_0 = arith.constant 0 : i32
    %c0_i32_1 = arith.constant 0 : i32
    return %c0_i32, %c0_i32_0 : i32, i32
  }
  func.func @transform_3(%arg0: i32) -> (i32, i32) {
    %c0_i32 = arith.constant 0 : i32
    %c0_i32_0 = arith.constant 0 : i32
    return %arg0, %c0_i32 : i32, i32
  }
}

</mosaic_0001>

<llo_original>
// kernel: conv_transpose_bias_clamp.1
$region0: #{conv_transpose_bias_clamp.1}
  #allocation0 [shape = 'u32[]', space=smem, size = 0x4, offset = 0x4, fixed_abs, tag = 'smem constant byte address 0x4 - core index']
  #allocation1 [shape = 'u32[144,128]{1,0:T(1,128)}', space=vmem, size = 0x12000, scoped, tag = 'internal scratch']
  %s0 = inlined_call_operand.vmem [shape: bf16[32,128], index: 0, kind: input, shape index: {}]
  %s1 = inlined_call_operand.vmem [shape: bf16[128,1024], index: 1, kind: input, shape index: {}]
  %s2 = inlined_call_operand.vmem [shape: f32[1,1024], index: 2, kind: input, shape index: {}]
  %s3 = inlined_call_operand.vmem [shape: f32[32,1024], index: 3, kind: output, shape index: {}]
  %s4 = sld [smem:[#allocation0]]
  $region22: #{conv_transpose_bias_clamp.1} parent=0
    _
  %s6 = ssub.s32 1, %s4
  %s7 = scalar_select 0, %s6, %s4
  // Predicated region
  $region2: #{conv_transpose_bias_clamp.1} parent=0 // pred_check
    _
  $region3: #{conv_transpose_bias_clamp.1} parent=0 // pred_check_branch
    %9 = sbr.rel (0) target = $region5
  $region4: #{conv_transpose_bias_clamp.1} parent=0 // pred_region
    _
  $region5: #{conv_transpose_bias_clamp.1} parent=0 // pred_fallthru
    _
  // Predicated region
  $region6: #{conv_transpose_bias_clamp.1} parent=0 // pred_check
    _
  $region7: #{conv_transpose_bias_clamp.1} parent=0 // pred_check_branch
    %11 = sbr.rel (0) target = $region9
  $region8: #{conv_transpose_bias_clamp.1} parent=0 // pred_region
    _
  $region9: #{conv_transpose_bias_clamp.1} parent=0 // pred_fallthru
    _
  // Predicated region
  $region10: #{conv_transpose_bias_clamp.1} parent=0 // pred_check
    _
  $region11: #{conv_transpose_bias_clamp.1} parent=0 // pred_check_branch
    %13 = sbr.rel (0) target = $region13
  $region12: #{conv_transpose_bias_clamp.1} parent=0 // pred_region
    _
  $region13: #{conv_transpose_bias_clamp.1} parent=0 // pred_fallthru
    _
  %v15 = vld [vmem:[%s0] sm:$0xf]
  %v16 = vld [vmem:[%s0 + $0x4] sm:$0xf]
  %v17 = vld [vmem:[%s0 + $0x8] sm:$0xf]
  %v18 = vld [vmem:[%s0 + $0xc] sm:$0xf]
  %v19 = vld [vmem:[%s1] sm:$0xff]
  %v20 = vld [vmem:[%s1 + $0x8] sm:$0xff]
  %v21 = vld [vmem:[%s1 + $0x10] sm:$0xff]
  %v22 = vld [vmem:[%s1 + $0x18] sm:$0xff]
  %v23 = vld [vmem:[%s1 + $0x20] sm:$0xff]
  %v24 = vld [vmem:[%s1 + $0x28] sm:$0xff]
  %v25 = vld [vmem:[%s1 + $0x30] sm:$0xff]
  %v26 = vld [vmem:[%s1 + $0x38] sm:$0xff]
  %v27 = vld [vmem:[%s1 + $0x40] sm:$0xff]
  %v28 = vld [vmem:[%s1 + $0x48] sm:$0xff]
  %v29 = vld [vmem:[%s1 + $0x50] sm:$0xff]
  %v30 = vld [vmem:[%s1 + $0x58] sm:$0xff]
  %v31 = vld [vmem:[%s1 + $0x60] sm:$0xff]
  %v32 = vld [vmem:[%s1 + $0x68] sm:$0xff]
  %v33 = vld [vmem:[%s1 + $0x70] sm:$0xff]
  %v34 = vld [vmem:[%s1 + $0x78] sm:$0xff]
  %v35 = vld [vmem:[%s1 + $0x80] sm:$0xff]
  %v36 = vld [vmem:[%s1 + $0x88] sm:$0xff]
  %v37 = vld [vmem:[%s1 + $0x90] sm:$0xff]
  %v38 = vld [vmem:[%s1 + $0x98] sm:$0xff]
  %v39 = vld [vmem:[%s1 + $0xa0] sm:$0xff]
  %v40 = vld [vmem:[%s1 + $0xa8] sm:$0xff]
  %v41 = vld [vmem:[%s1 + $0xb0] sm:$0xff]
  %v42 = vld [vmem:[%s1 + $0xb8] sm:$0xff]
  %v43 = vld [vmem:[%s1 + $0xc0] sm:$0xff]
  %v44 = vld [vmem:[%s1 + $0xc8] sm:$0xff]
  %v45 = vld [vmem:[%s1 + $0xd0] sm:$0xff]
  %v46 = vld [vmem:[%s1 + $0xd8] sm:$0xff]
  %v47 = vld [vmem:[%s1 + $0xe0] sm:$0xff]
  %v48 = vld [vmem:[%s1 + $0xe8] sm:$0xff]
  %v49 = vld [vmem:[%s1 + $0xf0] sm:$0xff]
  %v50 = vld [vmem:[%s1 + $0xf8] sm:$0xff]
  %v51 = vld [vmem:[%s1 + $0x100] sm:$0xff]
  %v52 = vld [vmem:[%s1 + $0x108] sm:$0xff]
  %v53 = vld [vmem:[%s1 + $0x110] sm:$0xff]
  %v54 = vld [vmem:[%s1 + $0x118] sm:$0xff]
  %v55 = vld [vmem:[%s1 + $0x120] sm:$0xff]
  %v56 = vld [vmem:[%s1 + $0x128] sm:$0xff]
  %v57 = vld [vmem:[%s1 + $0x130] sm:$0xff]
  %v58 = vld [vmem:[%s1 + $0x138] sm:$0xff]
  %v59 = vld [vmem:[%s1 + $0x140] sm:$0xff]
  %v60 = vld [vmem:[%s1 + $0x148] sm:$0xff]
  %v61 = vld [vmem:[%s1 + $0x150] sm:$0xff]
  %v62 = vld [vmem:[%s1 + $0x158] sm:$0xff]
  %v63 = vld [vmem:[%s1 + $0x160] sm:$0xff]
  %v64 = vld [vmem:[%s1 + $0x168] sm:$0xff]
  %v65 = vld [vmem:[%s1 + $0x170] sm:$0xff]
  %v66 = vld [vmem:[%s1 + $0x178] sm:$0xff]
  %v67 = vld [vmem:[%s1 + $0x180] sm:$0xff]
  %v68 = vld [vmem:[%s1 + $0x188] sm:$0xff]
  %v69 = vld [vmem:[%s1 + $0x190] sm:$0xff]
  %v70 = vld [vmem:[%s1 + $0x198] sm:$0xff]
  %v71 = vld [vmem:[%s1 + $0x1a0] sm:$0xff]
  %v72 = vld [vmem:[%s1 + $0x1a8] sm:$0xff]
  %v73 = vld [vmem:[%s1 + $0x1b0] sm:$0xff]
  %v74 = vld [vmem:[%s1 + $0x1b8] sm:$0xff]
  %v75 = vld [vmem:[%s1 + $0x1c0] sm:$0xff]
  %v76 = vld [vmem:[%s1 + $0x1c8] sm:$0xff]
  %v77 = vld [vmem:[%s1 + $0x1d0] sm:$0xff]
  %v78 = vld [vmem:[%s1 + $0x1d8] sm:$0xff]
  %v79 = vld [vmem:[%s1 + $0x1e0] sm:$0xff]
  %v80 = vld [vmem:[%s1 + $0x1e8] sm:$0xff]
  %v81 = vld [vmem:[%s1 + $0x1f0] sm:$0xff]
  %v82 = vld [vmem:[%s1 + $0x1f8] sm:$0xff]
  %v83 = vld [vmem:[%s2] sm:$0xff]
  %v85 = vlaneseq
  %v86 = vshrl.u32 %v85, 7
  %v87 = vsub.s32 0, %v86
  %v88 = vrot.slane %v83, %v87
  %v89 = vlaneseq
  %v90 = vshrl.u32 %v89, 7
  %v91 = vsub.s32 1, %v90
  %v92 = vrot.slane %v83, %v91
  %v93 = vlaneseq
  %v94 = vshrl.u32 %v93, 7
  %v95 = vsub.s32 2, %v94
  %v96 = vrot.slane %v83, %v95
  %v97 = vlaneseq
  %v98 = vshrl.u32 %v97, 7
  %v99 = vsub.s32 3, %v98
  %v100 = vrot.slane %v83, %v99
  %v101 = vlaneseq
  %v102 = vshrl.u32 %v101, 7
  %v103 = vsub.s32 4, %v102
  %v104 = vrot.slane %v83, %v103
  %v105 = vlaneseq
  %v106 = vshrl.u32 %v105, 7
  %v107 = vsub.s32 5, %v106
  %v108 = vrot.slane %v83, %v107
  %v109 = vlaneseq
  %v110 = vshrl.u32 %v109, 7
  %v111 = vsub.s32 6, %v110
  %v112 = vrot.slane %v83, %v111
  %v113 = vlaneseq
  %v114 = vshrl.u32 %v113, 7
  %v115 = vsub.s32 7, %v114
  %v116 = vrot.slane %v83, %v115
  %v129 = vunpack.c.l.b16 %v15
  %v130 = vunpack.c.l.b16 %v16
  %v131 = vunpack.c.l.b16 %v17
  %v132 = vunpack.c.l.b16 %v18
  %v133 = vpack.c.b16 %v130, %v129
  %v134 = vpack.c.b16 %v132, %v131
  %v201 = vunpack.c.l.b16 %v19
  %v202 = vunpack.c.h.b16 %v19
  %v203 = vunpack.c.l.b16 %v20
  %v204 = vunpack.c.h.b16 %v20
  %v205 = vunpack.c.l.b16 %v21
  %v206 = vunpack.c.h.b16 %v21
  %v207 = vunpack.c.l.b16 %v22
  %v208 = vunpack.c.h.b16 %v22
  %v209 = vunpack.c.l.b16 %v23
  %v210 = vunpack.c.h.b16 %v23
  %v211 = vunpack.c.l.b16 %v24
  %v212 = vunpack.c.h.b16 %v24
  %v213 = vunpack.c.l.b16 %v25
  %v214 = vunpack.c.h.b16 %v25
  %v215 = vunpack.c.l.b16 %v26
  %v216 = vunpack.c.h.b16 %v26
  %v217 = vunpack.c.l.b16 %v27
  %v218 = vunpack.c.h.b16 %v27
  %v219 = vunpack.c.l.b16 %v28
  %v220 = vunpack.c.h.b16 %v28
  %v221 = vunpack.c.l.b16 %v29
  %v222 = vunpack.c.h.b16 %v29
  %v223 = vunpack.c.l.b16 %v30
  %v224 = vunpack.c.h.b16 %v30
  %v225 = vunpack.c.l.b16 %v31
  %v226 = vunpack.c.h.b16 %v31
  %v227 = vunpack.c.l.b16 %v32
  %v228 = vunpack.c.h.b16 %v32
  %v229 = vunpack.c.l.b16 %v33
  %v230 = vunpack.c.h.b16 %v33
  %v231 = vunpack.c.l.b16 %v34
  %v232 = vunpack.c.h.b16 %v34
  %v233 = vunpack.c.l.b16 %v35
  %v234 = vunpack.c.h.b16 %v35
  %v235 = vunpack.c.l.b16 %v36
  %v236 = vunpack.c.h.b16 %v36
  %v237 = vunpack.c.l.b16 %v37
  %v238 = vunpack.c.h.b16 %v37
  %v239 = vunpack.c.l.b16 %v38
  %v240 = vunpack.c.h.b16 %v38
  %v241 = vunpack.c.l.b16 %v39
  %v242 = vunpack.c.h.b16 %v39
  %v243 = vunpack.c.l.b16 %v40
  %v244 = vunpack.c.h.b16 %v40
  %v245 = vunpack.c.l.b16 %v41
  %v246 = vunpack.c.h.b16 %v41
  %v247 = vunpack.c.l.b16 %v42
  %v248 = vunpack.c.h.b16 %v42
  %v249 = vunpack.c.l.b16 %v43
  %v250 = vunpack.c.h.b16 %v43
  %v251 = vunpack.c.l.b16 %v44
  %v252 = vunpack.c.h.b16 %v44
  %v253 = vunpack.c.l.b16 %v45
  %v254 = vunpack.c.h.b16 %v45
  %v255 = vunpack.c.l.b16 %v46
  %v256 = vunpack.c.h.b16 %v46
  %v257 = vunpack.c.l.b16 %v47
  %v258 = vunpack.c.h.b16 %v47
  %v259 = vunpack.c.l.b16 %v48
  %v260 = vunpack.c.h.b16 %v48
  %v261 = vunpack.c.l.b16 %v49
  %v262 = vunpack.c.h.b16 %v49
  %v263 = vunpack.c.l.b16 %v50
  %v264 = vunpack.c.h.b16 %v50
  %v265 = vunpack.c.l.b16 %v51
  %v266 = vunpack.c.h.b16 %v51
  %v267 = vunpack.c.l.b16 %v52
  %v268 = vunpack.c.h.b16 %v52
  %v269 = vunpack.c.l.b16 %v53
  %v270 = vunpack.c.h.b16 %v53
  %v271 = vunpack.c.l.b16 %v54
  %v272 = vunpack.c.h.b16 %v54
  %v273 = vunpack.c.l.b16 %v55
  %v274 = vunpack.c.h.b16 %v55
  %v275 = vunpack.c.l.b16 %v56
  %v276 = vunpack.c.h.b16 %v56
  %v277 = vunpack.c.l.b16 %v57
  %v278 = vunpack.c.h.b16 %v57
  %v279 = vunpack.c.l.b16 %v58
  %v280 = vunpack.c.h.b16 %v58
  %v281 = vunpack.c.l.b16 %v59
  %v282 = vunpack.c.h.b16 %v59
  %v283 = vunpack.c.l.b16 %v60
  %v284 = vunpack.c.h.b16 %v60
  %v285 = vunpack.c.l.b16 %v61
  %v286 = vunpack.c.h.b16 %v61
  %v287 = vunpack.c.l.b16 %v62
  %v288 = vunpack.c.h.b16 %v62
  %v289 = vunpack.c.l.b16 %v63
  %v290 = vunpack.c.h.b16 %v63
  %v291 = vunpack.c.l.b16 %v64
  %v292 = vunpack.c.h.b16 %v64
  %v293 = vunpack.c.l.b16 %v65
  %v294 = vunpack.c.h.b16 %v65
  %v295 = vunpack.c.l.b16 %v66
  %v296 = vunpack.c.h.b16 %v66
  %v297 = vunpack.c.l.b16 %v67
  %v298 = vunpack.c.h.b16 %v67
  %v299 = vunpack.c.l.b16 %v68
  %v300 = vunpack.c.h.b16 %v68
  %v301 = vunpack.c.l.b16 %v69
  %v302 = vunpack.c.h.b16 %v69
  %v303 = vunpack.c.l.b16 %v70
  %v304 = vunpack.c.h.b16 %v70
  %v305 = vunpack.c.l.b16 %v71
  %v306 = vunpack.c.h.b16 %v71
  %v307 = vunpack.c.l.b16 %v72
  %v308 = vunpack.c.h.b16 %v72
  %v309 = vunpack.c.l.b16 %v73
  %v310 = vunpack.c.h.b16 %v73
  %v311 = vunpack.c.l.b16 %v74
  %v312 = vunpack.c.h.b16 %v74
  %v313 = vunpack.c.l.b16 %v75
  %v314 = vunpack.c.h.b16 %v75
  %v315 = vunpack.c.l.b16 %v76
  %v316 = vunpack.c.h.b16 %v76
  %v317 = vunpack.c.l.b16 %v77
  %v318 = vunpack.c.h.b16 %v77
  %v319 = vunpack.c.l.b16 %v78
  %v320 = vunpack.c.h.b16 %v78
  %v321 = vunpack.c.l.b16 %v79
  %v322 = vunpack.c.h.b16 %v79
  %v323 = vunpack.c.l.b16 %v80
  %v324 = vunpack.c.h.b16 %v80
  %v325 = vunpack.c.l.b16 %v81
  %v326 = vunpack.c.h.b16 %v81
  %v327 = vunpack.c.l.b16 %v82
  %v328 = vunpack.c.h.b16 %v82
  %v329 = vpack.c.b16 %v209, %v201
  %v330 = vpack.c.b16 %v210, %v202
  %v331 = vpack.c.b16 %v211, %v203
  %v332 = vpack.c.b16 %v212, %v204
  %v333 = vpack.c.b16 %v213, %v205
  %v334 = vpack.c.b16 %v214, %v206
  %v335 = vpack.c.b16 %v215, %v207
  %v336 = vpack.c.b16 %v216, %v208
  %v337 = vpack.c.b16 %v225, %v217
  %v338 = vpack.c.b16 %v226, %v218
  %v339 = vpack.c.b16 %v227, %v219
  %v340 = vpack.c.b16 %v228, %v220
  %v341 = vpack.c.b16 %v229, %v221
  %v342 = vpack.c.b16 %v230, %v222
  %v343 = vpack.c.b16 %v231, %v223
  %v344 = vpack.c.b16 %v232, %v224
  %v345 = vpack.c.b16 %v241, %v233
  %v346 = vpack.c.b16 %v242, %v234
  %v347 = vpack.c.b16 %v243, %v235
  %v348 = vpack.c.b16 %v244, %v236
  %v349 = vpack.c.b16 %v245, %v237
  %v350 = vpack.c.b16 %v246, %v238
  %v351 = vpack.c.b16 %v247, %v239
  %v352 = vpack.c.b16 %v248, %v240
  %v353 = vpack.c.b16 %v257, %v249
  %v354 = vpack.c.b16 %v258, %v250
  %v355 = vpack.c.b16 %v259, %v251
  %v356 = vpack.c.b16 %v260, %v252
  %v357 = vpack.c.b16 %v261, %v253
  %v358 = vpack.c.b16 %v262, %v254
  %v359 = vpack.c.b16 %v263, %v255
  %v360 = vpack.c.b16 %v264, %v256
  %v361 = vpack.c.b16 %v273, %v265
  %v362 = vpack.c.b16 %v274, %v266
  %v363 = vpack.c.b16 %v275, %v267
  %v364 = vpack.c.b16 %v276, %v268
  %v365 = vpack.c.b16 %v277, %v269
  %v366 = vpack.c.b16 %v278, %v270
  %v367 = vpack.c.b16 %v279, %v271
  %v368 = vpack.c.b16 %v280, %v272
  %v369 = vpack.c.b16 %v289, %v281
  %v370 = vpack.c.b16 %v290, %v282
  %v371 = vpack.c.b16 %v291, %v283
  %v372 = vpack.c.b16 %v292, %v284
  %v373 = vpack.c.b16 %v293, %v285
  %v374 = vpack.c.b16 %v294, %v286
  %v375 = vpack.c.b16 %v295, %v287
  %v376 = vpack.c.b16 %v296, %v288
  %v377 = vpack.c.b16 %v305, %v297
  %v378 = vpack.c.b16 %v306, %v298
  %v379 = vpack.c.b16 %v307, %v299
  %v380 = vpack.c.b16 %v308, %v300
  %v381 = vpack.c.b16 %v309, %v301
  %v382 = vpack.c.b16 %v310, %v302
  %v383 = vpack.c.b16 %v311, %v303
  %v384 = vpack.c.b16 %v312, %v304
  %v385 = vpack.c.b16 %v321, %v313
  %v386 = vpack.c.b16 %v322, %v314
  %v387 = vpack.c.b16 %v323, %v315
  %v388 = vpack.c.b16 %v324, %v316
  %v389 = vpack.c.b16 %v325, %v317
  %v390 = vpack.c.b16 %v326, %v318
  %v391 = vpack.c.b16 %v327, %v319
  %v392 = vpack.c.b16 %v328, %v320
  %457 = vmatprep.subr.bf16.mxu0 %v330
  %458 = vmatpush1.bf16.msra.mxu0 %v329
  %459 = vmatprep.subr.bf16.mxu0 %v338
  %460 = vmatpush1.bf16.msra.mxu0 %v337
  %461 = vmatprep.subr.bf16.mxu0 %v346
  %462 = vmatpush1.bf16.msra.mxu0 %v345
  %463 = vmatprep.subr.bf16.mxu0 %v354
  %464 = vmatpush1.bf16.msra.mxu0 %v353
  %465 = vmatprep.subr.bf16.mxu0 %v362
  %466 = vmatpush1.bf16.msra.mxu0 %v361
  %467 = vmatprep.subr.bf16.mxu0 %v370
  %468 = vmatpush1.bf16.msra.mxu0 %v369
  %469 = vmatprep.subr.bf16.mxu0 %v378
  %470 = vmatpush1.bf16.msra.mxu0 %v377
  %471 = vmatprep.subr.bf16.mxu0 %v386
  %472 = vmatpush1.bf16.msra.mxu0 %v385
  %473 = vmatprep.subr.bf16.mxu0 0
  %474 = vmatpush1.bf16.msra.mxu0 0
  %475 = vmatprep.subr.bf16.mxu0 0
  %476 = vmatpush1.bf16.msra.mxu0 0
  %477 = vmatprep.subr.bf16.mxu0 0
  %478 = vmatpush1.bf16.msra.mxu0 0
  %479 = vmatprep.subr.bf16.mxu0 0
  %480 = vmatpush1.bf16.msra.mxu0 0
  %481 = vmatprep.subr.bf16.mxu0 0
  %482 = vmatpush1.bf16.msra.mxu0 0
  %483 = vmatprep.subr.bf16.mxu0 0
  %484 = vmatpush1.bf16.msra.mxu0 0
  %485 = vmatprep.subr.bf16.mxu0 0
  %486 = vmatpush1.bf16.msra.mxu0 0
  %487 = vmatprep.subr.bf16.mxu0 0
  %488 = vmatpush1.bf16.msra.mxu0 0
  %489 = vmatprep.mubr.bf16.mxu0 0
  %490 = vmatmul.mubr.bf16.gmra.mrb[0].mxu0 %v133
  %v491 = vpop.f32.mrb[0].mxu0
  %v492 = vadd.f32 %v88, %v491
  %v493 = vpop.f32.mrb[0].mxu0
  %v494 = vadd.f32 %v92, %v493
  %v495 = vpop.f32.mrb[0].mxu0
  %v496 = vadd.f32 %v88, %v495
  %v497 = vpop.f32.mrb[0].mxu0
  %v498 = vadd.f32 %v92, %v497
  %499 = vmatprep.mubr.bf16.mxu0 0
  %500 = vmatmul.mubr.bf16.gmra.mrb[0].mxu0 %v134
  %v501 = vpop.f32.mrb[0].mxu0
  %v502 = vadd.f32 %v88, %v501
  %v503 = vpop.f32.mrb[0].mxu0
  %v504 = vadd.f32 %v92, %v503
  %v505 = vpop.f32.mrb[0].mxu0
  %v506 = vadd.f32 %v88, %v505
  %v507 = vpop.f32.mrb[0].mxu0
  %v508 = vadd.f32 %v92, %v507
  %509 = vdwg.mxu0
  %510 = vmatprep.subr.bf16.mxu0 %v332
  %511 = vmatpush1.bf16.msra.mxu0 %v331
  %512 = vmatprep.subr.bf16.mxu0 %v340
  %513 = vmatpush1.bf16.msra.mxu0 %v339
  %514 = vmatprep.subr.bf16.mxu0 %v348
  %515 = vmatpush1.bf16.msra.mxu0 %v347
  %516 = vmatprep.subr.bf16.mxu0 %v356
  %517 = vmatpush1.bf16.msra.mxu0 %v355
  %518 = vmatprep.subr.bf16.mxu0 %v364
  %519 = vmatpush1.bf16.msra.mxu0 %v363
  %520 = vmatprep.subr.bf16.mxu0 %v372
  %521 = vmatpush1.bf16.msra.mxu0 %v371
  %522 = vmatprep.subr.bf16.mxu0 %v380
  %523 = vmatpush1.bf16.msra.mxu0 %v379
  %524 = vmatprep.subr.bf16.mxu0 %v388
  %525 = vmatpush1.bf16.msra.mxu0 %v387
  %526 = vmatprep.subr.bf16.mxu0 0
  %527 = vmatpush1.bf16.msra.mxu0 0
  %528 = vmatprep.subr.bf16.mxu0 0
  %529 = vmatpush1.bf16.msra.mxu0 0
  %530 = vmatprep.subr.bf16.mxu0 0
  %531 = vmatpush1.bf16.msra.mxu0 0
  %532 = vmatprep.subr.bf16.mxu0 0
  %533 = vmatpush1.bf16.msra.mxu0 0
  %534 = vmatprep.subr.bf16.mxu0 0
  %535 = vmatpush1.bf16.msra.mxu0 0
  %536 = vmatprep.subr.bf16.mxu0 0
  %537 = vmatpush1.bf16.msra.mxu0 0
  %538 = vmatprep.subr.bf16.mxu0 0
  %539 = vmatpush1.bf16.msra.mxu0 0
  %540 = vmatprep.subr.bf16.mxu0 0
  %541 = vmatpush1.bf16.msra.mxu0 0
  %542 = vmatprep.mubr.bf16.mxu0 0
  %543 = vmatmul.mubr.bf16.gmra.mrb[0].mxu0 %v133
  %v544 = vpop.f32.mrb[0].mxu0
  %v545 = vadd.f32 %v96, %v544
  %v546 = vpop.f32.mrb[0].mxu0
  %v547 = vadd.f32 %v100, %v546
  %v548 = vpop.f32.mrb[0].mxu0
  %v549 = vadd.f32 %v96, %v548
  %v550 = vpop.f32.mrb[0].mxu0
  %v551 = vadd.f32 %v100, %v550
  %552 = vmatprep.mubr.bf16.mxu0 0
  %553 = vmatmul.mubr.bf16.gmra.mrb[0].mxu0 %v134
  %v554 = vpop.f32.mrb[0].mxu0
  %v555 = vadd.f32 %v96, %v554
  %v556 = vpop.f32.mrb[0].mxu0
  %v557 = vadd.f32 %v100, %v556
  %v558 = vpop.f32.mrb[0].mxu0
  %v559 = vadd.f32 %v96, %v558
  %v560 = vpop.f32.mrb[0].mxu0
  %v561 = vadd.f32 %v100, %v560
  %562 = vdwg.mxu0
  %563 = vmatprep.subr.bf16.mxu0 %v334
  %564 = vmatpush1.bf16.msra.mxu0 %v333
  %565 = vmatprep.subr.bf16.mxu0 %v342
  %566 = vmatpush1.bf16.msra.mxu0 %v341
  %567 = vmatprep.subr.bf16.mxu0 %v350
  %568 = vmatpush1.bf16.msra.mxu0 %v349
  %569 = vmatprep.subr.bf16.mxu0 %v358
  %570 = vmatpush1.bf16.msra.mxu0 %v357
  %571 = vmatprep.subr.bf16.mxu0 %v366
  %572 = vmatpush1.bf16.msra.mxu0 %v365
  %573 = vmatprep.subr.bf16.mxu0 %v374
  %574 = vmatpush1.bf16.msra.mxu0 %v373
  %575 = vmatprep.subr.bf16.mxu0 %v382
  %576 = vmatpush1.bf16.msra.mxu0 %v381
  %577 = vmatprep.subr.bf16.mxu0 %v390
  %578 = vmatpush1.bf16.msra.mxu0 %v389
  %579 = vmatprep.subr.bf16.mxu0 0
  %580 = vmatpush1.bf16.msra.mxu0 0
  %581 = vmatprep.subr.bf16.mxu0 0
  %582 = vmatpush1.bf16.msra.mxu0 0
  %583 = vmatprep.subr.bf16.mxu0 0
  %584 = vmatpush1.bf16.msra.mxu0 0
  %585 = vmatprep.subr.bf16.mxu0 0
  %586 = vmatpush1.bf16.msra.mxu0 0
  %587 = vmatprep.subr.bf16.mxu0 0
  %588 = vmatpush1.bf16.msra.mxu0 0
  %589 = vmatprep.subr.bf16.mxu0 0
  %590 = vmatpush1.bf16.msra.mxu0 0
  %591 = vmatprep.subr.bf16.mxu0 0
  %592 = vmatpush1.bf16.msra.mxu0 0
  %593 = vmatprep.subr.bf16.mxu0 0
  %594 = vmatpush1.bf16.msra.mxu0 0
  %595 = vmatprep.mubr.bf16.mxu0 0
  %596 = vmatmul.mubr.bf16.gmra.mrb[0].mxu0 %v133
  %v597 = vpop.f32.mrb[0].mxu0
  %v598 = vadd.f32 %v104, %v597
  %v599 = vpop.f32.mrb[0].mxu0
  %v600 = vadd.f32 %v108, %v599
  %v601 = vpop.f32.mrb[0].mxu0
  %v602 = vadd.f32 %v104, %v601
  %v603 = vpop.f32.mrb[0].mxu0
  %v604 = vadd.f32 %v108, %v603
  %605 = vmatprep.mubr.bf16.mxu0 0
  %606 = vmatmul.mubr.bf16.gmra.mrb[0].mxu0 %v134
  %v607 = vpop.f32.mrb[0].mxu0
  %v608 = vadd.f32 %v104, %v607
  %v609 = vpop.f32.mrb[0].mxu0
  %v610 = vadd.f32 %v108, %v609
  %v611 = vpop.f32.mrb[0].mxu0
  %v612 = vadd.f32 %v104, %v611
  %v613 = vpop.f32.mrb[0].mxu0
  %v614 = vadd.f32 %v108, %v613
  %615 = vdwg.mxu0
  %616 = vmatprep.subr.bf16.mxu0 %v336
  %617 = vmatpush1.bf16.msra.mxu0 %v335
  %618 = vmatprep.subr.bf16.mxu0 %v344
  %619 = vmatpush1.bf16.msra.mxu0 %v343
  %620 = vmatprep.subr.bf16.mxu0 %v352
  %621 = vmatpush1.bf16.msra.mxu0 %v351
  %622 = vmatprep.subr.bf16.mxu0 %v360
  %623 = vmatpush1.bf16.msra.mxu0 %v359
  %624 = vmatprep.subr.bf16.mxu0 %v368
  %625 = vmatpush1.bf16.msra.mxu0 %v367
  %626 = vmatprep.subr.bf16.mxu0 %v376
  %627 = vmatpush1.bf16.msra.mxu0 %v375
  %628 = vmatprep.subr.bf16.mxu0 %v384
  %629 = vmatpush1.bf16.msra.mxu0 %v383
  %630 = vmatprep.subr.bf16.mxu0 %v392
  %631 = vmatpush1.bf16.msra.mxu0 %v391
  %632 = vmatprep.subr.bf16.mxu0 0
  %633 = vmatpush1.bf16.msra.mxu0 0
  %634 = vmatprep.subr.bf16.mxu0 0
  %635 = vmatpush1.bf16.msra.mxu0 0
  %636 = vmatprep.subr.bf16.mxu0 0
  %637 = vmatpush1.bf16.msra.mxu0 0
  %638 = vmatprep.subr.bf16.mxu0 0
  %639 = vmatpush1.bf16.msra.mxu0 0
  %640 = vmatprep.subr.bf16.mxu0 0
  %641 = vmatpush1.bf16.msra.mxu0 0
  %642 = vmatprep.subr.bf16.mxu0 0
  %643 = vmatpush1.bf16.msra.mxu0 0
  %644 = vmatprep.subr.bf16.mxu0 0
  %645 = vmatpush1.bf16.msra.mxu0 0
  %646 = vmatprep.subr.bf16.mxu0 0
  %647 = vmatpush1.bf16.msra.mxu0 0
  %648 = vmatprep.mubr.bf16.mxu0 0
  %649 = vmatmul.mubr.bf16.gmra.mrb[0].mxu0 %v133
  %v650 = vpop.f32.mrb[0].mxu0
  %v651 = vadd.f32 %v112, %v650
  %v652 = vpop.f32.mrb[0].mxu0
  %v653 = vadd.f32 %v116, %v652
  %v654 = vpop.f32.mrb[0].mxu0
  %v655 = vadd.f32 %v112, %v654
  %v656 = vpop.f32.mrb[0].mxu0
  %v657 = vadd.f32 %v116, %v656
  %658 = vmatprep.mubr.bf16.mxu0 0
  %659 = vmatmul.mubr.bf16.gmra.mrb[0].mxu0 %v134
  %v660 = vpop.f32.mrb[0].mxu0
  %v661 = vadd.f32 %v112, %v660
  %v662 = vpop.f32.mrb[0].mxu0
  %v663 = vadd.f32 %v116, %v662
  %v664 = vpop.f32.mrb[0].mxu0
  %v665 = vadd.f32 %v112, %v664
  %v666 = vpop.f32.mrb[0].mxu0
  %v667 = vadd.f32 %v116, %v666
  %668 = vdwg.mxu0
  %v669 = vmax.f32 %v492, 0.0
  %v670 = vmax.f32 %v494, 0.0
  %v671 = vmax.f32 %v545, 0.0
  %v672 = vmax.f32 %v547, 0.0
  %v673 = vmax.f32 %v598, 0.0
  %v674 = vmax.f32 %v600, 0.0
  %v675 = vmax.f32 %v651, 0.0
  %v676 = vmax.f32 %v653, 0.0
  %v677 = vmax.f32 %v496, 0.0
  %v678 = vmax.f32 %v498, 0.0
  %v679 = vmax.f32 %v549, 0.0
  %v680 = vmax.f32 %v551, 0.0
  %v681 = vmax.f32 %v602, 0.0
  %v682 = vmax.f32 %v604, 0.0
  %v683 = vmax.f32 %v655, 0.0
  %v684 = vmax.f32 %v657, 0.0
  %v685 = vmax.f32 %v502, 0.0
  %v686 = vmax.f32 %v504, 0.0
  %v687 = vmax.f32 %v555, 0.0
  %v688 = vmax.f32 %v557, 0.0
  %v689 = vmax.f32 %v608, 0.0
  %v690 = vmax.f32 %v610, 0.0
  %v691 = vmax.f32 %v661, 0.0
  %v692 = vmax.f32 %v663, 0.0
  %v693 = vmax.f32 %v506, 0.0
  %v694 = vmax.f32 %v508, 0.0
  %v695 = vmax.f32 %v559, 0.0
  %v696 = vmax.f32 %v561, 0.0
  %v697 = vmax.f32 %v612, 0.0
  %v698 = vmax.f32 %v614, 0.0
  %v699 = vmax.f32 %v665, 0.0
  %v700 = vmax.f32 %v667, 0.0
  %v701 = vmin.f32 %v669, 0.5
  %v702 = vmin.f32 %v670, 0.5
  %v703 = vmin.f32 %v671, 0.5
  %v704 = vmin.f32 %v672, 0.5
  %v705 = vmin.f32 %v673, 0.5
  %v706 = vmin.f32 %v674, 0.5
  %v707 = vmin.f32 %v675, 0.5
  %v708 = vmin.f32 %v676, 0.5
  %v709 = vmin.f32 %v677, 0.5
  %v710 = vmin.f32 %v678, 0.5
  %v711 = vmin.f32 %v679, 0.5
  %v712 = vmin.f32 %v680, 0.5
  %v713 = vmin.f32 %v681, 0.5
  %v714 = vmin.f32 %v682, 0.5
  %v715 = vmin.f32 %v683, 0.5
  %v716 = vmin.f32 %v684, 0.5
  %v717 = vmin.f32 %v685, 0.5
  %v718 = vmin.f32 %v686, 0.5
  %v719 = vmin.f32 %v687, 0.5
  %v720 = vmin.f32 %v688, 0.5
  %v721 = vmin.f32 %v689, 0.5
  %v722 = vmin.f32 %v690, 0.5
  %v723 = vmin.f32 %v691, 0.5
  %v724 = vmin.f32 %v692, 0.5
  %v725 = vmin.f32 %v693, 0.5
  %v726 = vmin.f32 %v694, 0.5
  %v727 = vmin.f32 %v695, 0.5
  %v728 = vmin.f32 %v696, 0.5
  %v729 = vmin.f32 %v697, 0.5
  %v730 = vmin.f32 %v698, 0.5
  %v731 = vmin.f32 %v699, 0.5
  %v732 = vmin.f32 %v700, 0.5
  %733 = vst [vmem:[%s3] sm:$0xff] %v701
  %734 = vst [vmem:[%s3 + $0x8] sm:$0xff] %v702
  %735 = vst [vmem:[%s3 + $0x10] sm:$0xff] %v703
  %736 = vst [vmem:[%s3 + $0x18] sm:$0xff] %v704
  %737 = vst [vmem:[%s3 + $0x20] sm:$0xff] %v705
  %738 = vst [vmem:[%s3 + $0x28] sm:$0xff] %v706
  %739 = vst [vmem:[%s3 + $0x30] sm:$0xff] %v707
  %740 = vst [vmem:[%s3 + $0x38] sm:$0xff] %v708
  %741 = vst [vmem:[%s3 + $0x40] sm:$0xff] %v709
  %742 = vst [vmem:[%s3 + $0x48] sm:$0xff] %v710
  %743 = vst [vmem:[%s3 + $0x50] sm:$0xff] %v711
  %744 = vst [vmem:[%s3 + $0x58] sm:$0xff] %v712
  %745 = vst [vmem:[%s3 + $0x60] sm:$0xff] %v713
  %746 = vst [vmem:[%s3 + $0x68] sm:$0xff] %v714
  %747 = vst [vmem:[%s3 + $0x70] sm:$0xff] %v715
  %748 = vst [vmem:[%s3 + $0x78] sm:$0xff] %v716
  %749 = vst [vmem:[%s3 + $0x80] sm:$0xff] %v717
  %750 = vst [vmem:[%s3 + $0x88] sm:$0xff] %v718
  %751 = vst [vmem:[%s3 + $0x90] sm:$0xff] %v719
  %752 = vst [vmem:[%s3 + $0x98] sm:$0xff] %v720
  %753 = vst [vmem:[%s3 + $0xa0] sm:$0xff] %v721
  %754 = vst [vmem:[%s3 + $0xa8] sm:$0xff] %v722
  %755 = vst [vmem:[%s3 + $0xb0] sm:$0xff] %v723
  %756 = vst [vmem:[%s3 + $0xb8] sm:$0xff] %v724
  %757 = vst [vmem:[%s3 + $0xc0] sm:$0xff] %v725
  %758 = vst [vmem:[%s3 + $0xc8] sm:$0xff] %v726
  %759 = vst [vmem:[%s3 + $0xd0] sm:$0xff] %v727
  %760 = vst [vmem:[%s3 + $0xd8] sm:$0xff] %v728
  %761 = vst [vmem:[%s3 + $0xe0] sm:$0xff] %v729
  %762 = vst [vmem:[%s3 + $0xe8] sm:$0xff] %v730
  %763 = vst [vmem:[%s3 + $0xf0] sm:$0xff] %v731
  %764 = vst [vmem:[%s3 + $0xf8] sm:$0xff] %v732
  // Predicated region
  $region14: #{conv_transpose_bias_clamp.1} parent=0 // pred_check
    _
  $region15: #{conv_transpose_bias_clamp.1} parent=0 // pred_check_branch
    %766 = sbr.rel (0) target = $region17
  $region16: #{conv_transpose_bias_clamp.1} parent=0 // pred_region
    _
  $region17: #{conv_transpose_bias_clamp.1} parent=0 // pred_fallthru
    _
  // Predicated region
  $region18: #{conv_transpose_bias_clamp.1} parent=0 // pred_check
    _
  $region19: #{conv_transpose_bias_clamp.1} parent=0 // pred_check_branch
    %768 = sbr.rel (0) target = $region21
  $region20: #{conv_transpose_bias_clamp.1} parent=0 // pred_region
    _
  $region21: #{conv_transpose_bias_clamp.1} parent=0 // pred_fallthru
    _

</llo_original>
